<compile_context>
chip_gen: v7x
topology: tpu7x:2x2x1
jax: 0.10.0
libtpu: 0.0.40
codegen_flags: <defaults>
</compile_context>

<pallas_src>
import functools
import math

import jax
import jax.numpy as jnp
from jax.experimental import pallas as pl
from jax.experimental.pallas import tpu as pltpu


def _round_up(x, m):
    return ((x + m - 1) // m) * m


def _cdiv(a, b):
    return -(-a // b)


def _vmem_budget():
    """(vmem_limit_bytes, max_folded_block_rows) per TPU generation."""
    vmem_cap = 128 * 1024 * 1024
    try:
        info = pltpu.get_tpu_info()
        cap = getattr(info, "vmem_capacity_bytes", None)
        if cap:
            vmem_cap = int(cap)
    except Exception:
        pass
    if vmem_cap <= 64 * 1024 * 1024:
        # v7x: 64 MiB per TensorCore -> stay well under, ~8K-row tiles already
        # amortize the ~0.35 us per-step pipeline overhead fully.
        return 48 * 1024 * 1024, 8192
    # v5e / v6e: 128 MiB physical VMEM.
    return 64 * 1024 * 1024, 16384


def fc1_kernel(x_ref, w_ref, b_ref, o_ref, *, compute_dtype):
    # x_ref: (TM, Kf) native dtype, w_ref: (Kf, Nf) compute dtype,
    # b_ref: (1, Nf) f32, o_ref: (TM, Nf) out dtype.
    x = x_ref[...].astype(compute_dtype)          # in-kernel cast (free VPU op)
    y = jnp.dot(x, w_ref[...], preferred_element_type=jnp.float32)
    y = y + b_ref[...]                            # f32 bias broadcast over rows
    # leaky_relu with PyTorch default negative_slope = 0.01
    o_ref[...] = jnp.where(y > 0, y, 0.01 * y).astype(o_ref.dtype)


def prepare_fc1(w, b, *, compute_dtype=jnp.bfloat16, target_nf=256,
                max_folded_w_bytes=4 * 1024 * 1024):
    """Precompute (once per weight) the block-diagonal W / tiled bias.

    w: (K, N) == transpose of PyTorch's (N, K) layout; b: (N,).
    """
    K, N = w.shape
    itemsize = jnp.dtype(compute_dtype).itemsize
    if N % 128 == 0:
        fold = 1
    else:
        fold = math.lcm(N, 128) // N              # smallest fold: Nf % 128 == 0
        # Widen towards target_nf (fills the 256-wide MXU of v6e/v7x). Purely
        # a minor free win — the kernel is memory-bound on every generation.
        while (fold * N < target_nf
               and (2 * fold * K) * (2 * fold * N) * itemsize <= max_folded_w_bytes):
            fold *= 2
        if (fold * K) * (fold * N) * itemsize > max_folded_w_bytes:
            fold = 1                              # fallback: lane-sparse output
    Kf, Nf = fold * K, fold * N

    if fold > 1:
        # Block-diagonal expansion: `fold` copies of (K, N) on the diagonal.
        w_big = jnp.kron(jnp.eye(fold, dtype=jnp.float32), w.astype(jnp.float32))
    else:
        w_big = w.astype(jnp.float32)
    w_big = w_big.astype(compute_dtype)
    b_big = jnp.tile(b.astype(jnp.float32), fold).reshape(1, Nf)

    return {"w_big": w_big, "b_big": b_big, "fold": fold, "K": K, "N": N,
            "Kf": Kf, "Nf": Nf, "compute_dtype": compute_dtype}


def fc1_forward(x, params, *, block_rows=None, out_dtype=jnp.float32):
    """x: (..., K) -> leaky_relu(x @ w + b): (..., N).  Eval-mode dropout."""
    w_big, b_big = params["w_big"], params["b_big"]
    fold, K, N = params["fold"], params["K"], params["N"]
    Kf, Nf = params["Kf"], params["Nf"]
    compute_dtype = params["compute_dtype"]

    orig_lead = x.shape[:-1]
    x2d = x.reshape(-1, K)                        # free row-major reshape
    M = x2d.shape[0]

    # Pad only to a multiple of `fold` (<= fold-1 rows; usually 0).
    pad_rows = (-M) % fold
    if pad_rows:
        x2d = jnp.pad(x2d, ((0, pad_rows), (0, 0)))
    Mg = (M + pad_rows) // fold
    x_folded = x2d.reshape(Mg, Kf)                # free; cast happens in-kernel

    # ---- per-generation tiling -------------------------------------------
    vmem_limit, max_rows = _vmem_budget()
    if block_rows is None:
        block_rows = max_rows
    block_rows = max(16, _round_up(int(block_rows), 16))  # sublane-pack safe

    tm = min(block_rows, _round_up(Mg, 16))
    # Keep >= MIN_STEPS grid steps for large problems so both v7x TensorCores
    # (and the DMA pipeline) stay busy.
    MIN_STEPS = 4
    if Mg >= MIN_STEPS * 16:
        tm = min(tm, _round_up(_cdiv(Mg, MIN_STEPS), 16))
    # VMEM safety cap: double-buffered x + out plus resident W/b + headroom.
    x_itemsize = jnp.dtype(x.dtype).itemsize
    out_itemsize = jnp.dtype(out_dtype).itemsize
    w_bytes = int(w_big.size) * w_big.dtype.itemsize
    row_bytes = Kf * x_itemsize + Nf * out_itemsize
    row_budget = (vmem_limit - 2 * w_bytes - (2 << 20)) // (2 * row_bytes)
    tm = max(16, min(tm, (row_budget // 16) * 16))

    grid = (_cdiv(Mg, tm),)                       # ragged last block is masked
    cost = pl.CostEstimate(
        flops=2 * Mg * Kf * Nf,
        transcendentals=0,
        bytes_accessed=(Mg * Kf * x_itemsize      # x (streamed, native dtype)
                        + w_bytes                 # W (resident, one DMA)
                        + Nf * 4                  # b
                        + Mg * Nf * out_itemsize),  # out (streamed)
    )

    out_folded = pl.pallas_call(
        functools.partial(fc1_kernel, compute_dtype=compute_dtype),
        out_shape=jax.ShapeDtypeStruct((Mg, Nf), out_dtype),
        grid=grid,
        in_specs=[
            pl.BlockSpec((tm, Kf), lambda i: (i, 0)),   # x: streamed over rows
            pl.BlockSpec((Kf, Nf), lambda i: (0, 0)),   # W: resident
            pl.BlockSpec((1, Nf), lambda i: (0, 0)),    # b: resident
        ],
        out_specs=pl.BlockSpec((tm, Nf), lambda i: (i, 0)),
        compiler_params=pltpu.CompilerParams(
            dimension_semantics=("parallel",),          # v7x: shard M over 2 TCs
            vmem_limit_bytes=vmem_limit,
        ),
        cost_estimate=cost,
    )(x_folded, w_big, b_big)

    out = out_folded.reshape(Mg * fold, N)        # free un-fold
    if pad_rows:
        out = out[:M]                             # trim <= fold-1 garbage rows
    return out.reshape(*orig_lead, N)


def init_fc1_params(key, pos_enc_dim, nout):
    """Deterministic init mimicking nn.Linear defaults (uniform +-1/sqrt(fan_in))."""
    kw, kb = jax.random.split(key)
    bound = 1.0 / jnp.sqrt(pos_enc_dim)
    # Stored as (pos_enc_dim, nout) == transpose of PyTorch's (nout, pos_enc_dim).
    w = jax.random.uniform(kw, (pos_enc_dim, nout), jnp.float32, -bound, bound)
    b = jax.random.uniform(kb, (nout,), jnp.float32, -bound, bound)
    return w, b


if __name__ == "__main__":
    key = jax.random.PRNGKey(0)
    k_x, k_p = jax.random.split(key)

    batch, seq, pos_enc_dim, nout = 2, 8, 32, 16
    x = jax.random.normal(k_x, (batch, seq, pos_enc_dim), jnp.float32)
    w, b = init_fc1_params(k_p, pos_enc_dim, nout)

    # Reference in plain JAX (eval-mode dropout == identity).
    ref = x.reshape(-1, pos_enc_dim) @ w + b
    ref = jnp.where(ref > 0, ref, 0.01 * ref).reshape(batch, seq, nout)

    # Exact f32 compute path (tight tolerance).
    params_f32 = prepare_fc1(w, b, compute_dtype=jnp.float32)
    out_f32 = fc1_forward(x, params_f32)
    jax.block_until_ready(out_f32)
    assert out_f32.shape == (batch, seq, nout)
    assert jnp.allclose(out_f32, ref, atol=1e-5), "f32 mismatch vs reference"

    # Default bf16-MXU / f32-accumulate path (bandwidth-optimized).
    params_bf16 = prepare_fc1(w, b)               # precomputed once per weight
    out_bf16 = fc1_forward(x, params_bf16)
    jax.block_until_ready(out_bf16)
    assert out_bf16.shape == (batch, seq, nout)
    assert jnp.allclose(out_bf16, ref, rtol=2e-2, atol=2e-2), "bf16 mismatch vs reference"

    print("KERNEL_OK")
</pallas_src>

<mosaic_0001>
module attributes {stable_mosaic.version = 11 : i64} {
  func.func @fc1_kernel(%arg0: i32, %arg1: memref<16x512xf32, #tpu.memory_space<vmem>>, %arg2: memref<512x256xf32, #tpu.memory_space<vmem>>, %arg3: memref<1x256xf32, #tpu.memory_space<vmem>>, %arg4: memref<16x256xf32, #tpu.memory_space<vmem>>) attributes {dimension_semantics = [#tpu.dimension_semantics<parallel>], iteration_bounds = array<i64: 1>, scalar_prefetch = 0 : i64, scratch_operands = 0 : i64, tpu.core_type = #tpu.core_type<tc>, window_params = [{transform_indices = @transform_0, window_bounds = array<i64: 16, 512>}, {pipeline_mode = #tpu.pipeline_mode<synchronous>, transform_indices = @transform_1, window_bounds = array<i64: 512, 256>}, {pipeline_mode = #tpu.pipeline_mode<synchronous>, transform_indices = @transform_2, window_bounds = array<i64: 1, 256>}, {transform_indices = @transform_3, window_bounds = array<i64: 16, 256>}]} {
    %c0 = arith.constant 0 : index
    %c0_0 = arith.constant 0 : index
    %0 = vector.load %arg1[%c0, %c0_0] : memref<16x512xf32, #tpu.memory_space<vmem>>, vector<16x512xf32>
    %c0_1 = arith.constant 0 : index
    %c0_2 = arith.constant 0 : index
    %1 = vector.load %arg2[%c0_1, %c0_2] : memref<512x256xf32, #tpu.memory_space<vmem>>, vector<512x256xf32>
    %cst = arith.constant dense<0.000000e+00> : vector<16x256xf32>
    %2 = tpu.matmul %0, %1, %cst {dimension_numbers = #tpu.dot_dimension_numbers<[1], [0], [0], [1], [0, 0, 1, 1], [], []>} : vector<16x512xf32>, vector<512x256xf32>, vector<16x256xf32> -> vector<16x256xf32>
    %c0_3 = arith.constant 0 : index
    %c0_4 = arith.constant 0 : index
    %3 = vector.load %arg3[%c0_3, %c0_4] : memref<1x256xf32, #tpu.memory_space<vmem>>, vector<1x256xf32>
    %4 = vector.broadcast %3 : vector<1x256xf32> to vector<16x256xf32>
    %5 = arith.addf %2, %4 : vector<16x256xf32>
    %cst_5 = arith.constant 0.000000e+00 : f32
    %6 = vector.broadcast %cst_5 : f32 to vector<16x256xf32>
    %7 = arith.cmpf ogt, %5, %6 : vector<16x256xf32>
    %cst_6 = arith.constant 0.00999999977 : f32
    %8 = vector.broadcast %cst_6 : f32 to vector<16x256xf32>
    %9 = arith.mulf %8, %5 : vector<16x256xf32>
    %10 = arith.select %7, %5, %9 : vector<16x256xi1>, vector<16x256xf32>
    %c0_7 = arith.constant 0 : index
    %c0_8 = arith.constant 0 : index
    %11 = vector.load %arg4[%c0_7, %c0_8] : memref<16x256xf32, #tpu.memory_space<vmem>>, vector<16x256xf32>
    tpu.vector_store %arg4[%c0_7, %c0_8], %10 {strides = array<i32>} : memref<16x256xf32, #tpu.memory_space<vmem>>, vector<16x256xf32>,
    return
  }
  func.func @transform_0(%arg0: i32) -> (i32, i32) {
    %c0_i32 = arith.constant 0 : i32
    %c0_i32_0 = arith.constant 0 : i32
    return %arg0, %c0_i32 : i32, i32
  }
  func.func @transform_1(%arg0: i32) -> (i32, i32) {
    %c0_i32 = arith.constant 0 : i32
    %c0_i32_0 = arith.constant 0 : i32
    %c0_i32_1 = arith.constant 0 : i32
    return %c0_i32, %c0_i32_0 : i32, i32
  }
  func.func @transform_2(%arg0: i32) -> (i32, i32) {
    %c0_i32 = arith.constant 0 : i32
    %c0_i32_0 = arith.constant 0 : i32
    %c0_i32_1 = arith.constant 0 : i32
    return %c0_i32, %c0_i32_0 : i32, i32
  }
  func.func @transform_3(%arg0: i32) -> (i32, i32) {
    %c0_i32 = arith.constant 0 : i32
    %c0_i32_0 = arith.constant 0 : i32
    return %arg0, %c0_i32 : i32, i32
  }
}

</mosaic_0001>

<llo_original>
// kernel: tpu_custom_call.1
$region0: #{tpu_custom_call.1}
  #allocation0 [shape = 'u32[]', space=smem, size = 0x4, offset = 0x4, fixed_abs, tag = 'smem constant byte address 0x4 - core index']
  #allocation1 [shape = 'u32[144,128]{1,0:T(1,128)}', space=vmem, size = 0x12000, scoped, tag = 'internal scratch']
  %s0 = inlined_call_operand.hbm [shape: f32[1,512], index: 0, kind: input, shape index: {}]
  %s1 = inlined_call_operand.hbm [shape: f32[512,256], index: 1, kind: input, shape index: {}]
  %s2 = inlined_call_operand.hbm [shape: f32[1,256], index: 2, kind: input, shape index: {}]
  %s3 = inlined_call_operand.hbm [shape: f32[1,256], index: 3, kind: output, shape index: {}]
  %s4 = sld [smem:[#allocation0]]
  $region34: #{tpu_custom_call.1} parent=0
    _
  %s6 = ssub.s32 1, %s4
  %s7 = scalar_select 0, %s6, %s4
  $region1: #{tpu_custom_call.1} parent=0
    #allocation2 [shape = 'u8[32768]{0}', space=vmem, size = 0x8000, scoped, tag = 'input window, operand 0, single buffered']
    #allocation3 [shape = 's32[1]{0}', space=sflag, size = 0x4, scoped, tag = 'scoped memory for tpu_custom_call.1']
    #allocation4 [shape = 's32[1]{0}', space=sflag, size = 0x4, scoped, tag = 'scoped memory for tpu_custom_call.1']
    #allocation5 [shape = 'u8[524288]{0}', space=vmem, size = 0x80000, scoped, tag = 'input window, operand 1, single buffered']
    #allocation6 [shape = 's32[1]{0}', space=sflag, size = 0x4, scoped, tag = 'scoped memory for tpu_custom_call.1']
    #allocation7 [shape = 'u8[1024]{0}', space=vmem, size = 0x400, scoped, tag = 'input window, operand 2, single buffered']
    #allocation8 [shape = 'u8[16384]{0}', space=vmem, size = 0x4000, scoped, tag = 'output window, operand 0, single buffered']
    %8 = vsyncpa [#allocation3], 0
    %9 = vsyncpa [#allocation6], 0
    %10 = vsyncpa [#allocation4], 0
    // Predicated region
    $region2: #{tpu_custom_call.1} parent=1 // pred_check
      _
    $region3: #{tpu_custom_call.1} parent=1 // pred_check_branch
      %12 = sbr.rel (0) target = $region5
    $region4: #{tpu_custom_call.1} parent=1 // pred_region
      %s14 = ssub.s32 1024, 64
      %15 = vsyncadd [#allocation3], %s14
      %s16 = sshll.u32 [#allocation2], 4
      %s17 = int_to_ptr.vmem [resolvable:$true] %s16
      %22 = dma.hbm_to_vmem [thread:$0]  %s0, 64, %s17, [#allocation3], 64, 64, 4
    $region5: #{tpu_custom_call.1} parent=1 // pred_fallthru
      _
    // Predicated region
    $region6: #{tpu_custom_call.1} parent=1 // pred_check
      _
    $region7: #{tpu_custom_call.1} parent=1 // pred_check_branch
      %24 = sbr.rel (0) target = $region9
    $region8: #{tpu_custom_call.1} parent=1 // pred_region
      %s26 = ssub.s32 16384, 16384
      %27 = vsyncadd [#allocation6], %s26
      %s28 = sshll.u32 [#allocation5], 4
      %s29 = int_to_ptr.vmem [resolvable:$true] %s28
      %34 = dma.hbm_to_vmem [thread:$0]  %s1, 16384, %s29, [#allocation6], 256, 256, 16
    $region9: #{tpu_custom_call.1} parent=1 // pred_fallthru
      _
    // Predicated region
    $region10: #{tpu_custom_call.1} parent=1 // pred_check
      _
    $region11: #{tpu_custom_call.1} parent=1 // pred_check_branch
      %36 = sbr.rel (0) target = $region13
    $region12: #{tpu_custom_call.1} parent=1 // pred_region
      %s38 = ssub.s32 32, 32
      %39 = vsyncadd [#allocation6], %s38
      %s41 = sshll.u32 [#allocation7], 4
      %s42 = int_to_ptr.vmem [resolvable:$true] %s41
      %44 = dma.hbm_to_vmem [thread:$0]  %s2, 32, %s42, [#allocation6]
    $region13: #{tpu_custom_call.1} parent=1 // pred_fallthru
      _
    // Predicated region
    $region14: #{tpu_custom_call.1} parent=1 // pred_check
      _
    $region15: #{tpu_custom_call.1} parent=1 // pred_check_branch
      %46 = sbr.rel (0) target = $region17
    $region16: #{tpu_custom_call.1} parent=1 // pred_region
      %47 = dma.done [#allocation3], 1024
    $region17: #{tpu_custom_call.1} parent=1 // pred_fallthru
      _
    // Predicated region
    $region18: #{tpu_custom_call.1} parent=1 // pred_check
      _
    $region19: #{tpu_custom_call.1} parent=1 // pred_check_branch
      %49 = sbr.rel (0) target = $region21
    $region20: #{tpu_custom_call.1} parent=1 // pred_region
      %50 = dma.done [#allocation6], 16384
    $region21: #{tpu_custom_call.1} parent=1 // pred_fallthru
      _
    // Predicated region
    $region22: #{tpu_custom_call.1} parent=1 // pred_check
      _
    $region23: #{tpu_custom_call.1} parent=1 // pred_check_branch
      %52 = sbr.rel (0) target = $region25
    $region24: #{tpu_custom_call.1} parent=1 // pred_region
      %53 = dma.done [#allocation6], 32
    $region25: #{tpu_custom_call.1} parent=1 // pred_fallthru
      _
    %v54 = vld [vmem:[#allocation2] sm:$0xf]
    %v55 = vld [vmem:[#allocation2 + $0x4] sm:$0xf]
    %v56 = vld [vmem:[#allocation2 + $0x8] sm:$0xf]
    %v57 = vld [vmem:[#allocation2 + $0xc] sm:$0xf]
    %v58 = vld [vmem:[#allocation2 + $0x10] sm:$0xf]
    %v59 = vld [vmem:[#allocation2 + $0x14] sm:$0xf]
    %v60 = vld [vmem:[#allocation2 + $0x18] sm:$0xf]
    %v61 = vld [vmem:[#allocation2 + $0x1c] sm:$0xf]
    %v62 = vld [vmem:[#allocation2 + $0x20] sm:$0xf]
    %v63 = vld [vmem:[#allocation2 + $0x24] sm:$0xf]
    %v64 = vld [vmem:[#allocation2 + $0x28] sm:$0xf]
    %v65 = vld [vmem:[#allocation2 + $0x2c] sm:$0xf]
    %v66 = vld [vmem:[#allocation2 + $0x30] sm:$0xf]
    %v67 = vld [vmem:[#allocation2 + $0x34] sm:$0xf]
    %v68 = vld [vmem:[#allocation2 + $0x38] sm:$0xf]
    %v69 = vld [vmem:[#allocation2 + $0x3c] sm:$0xf]
    %v70 = vld [vmem:[#allocation5] sm:$0xff]
    %v71 = vld [vmem:[#allocation5 + $0x8] sm:$0xff]
    %v72 = vld [vmem:[#allocation5 + $0x10] sm:$0xff]
    %v73 = vld [vmem:[#allocation5 + $0x18] sm:$0xff]
    %v74 = vld [vmem:[#allocation5 + $0x20] sm:$0xff]
    %v75 = vld [vmem:[#allocation5 + $0x28] sm:$0xff]
    %v76 = vld [vmem:[#allocation5 + $0x30] sm:$0xff]
    %v77 = vld [vmem:[#allocation5 + $0x38] sm:$0xff]
    %v78 = vld [vmem:[#allocation5 + $0x40] sm:$0xff]
    %v79 = vld [vmem:[#allocation5 + $0x48] sm:$0xff]
    %v80 = vld [vmem:[#allocation5 + $0x50] sm:$0xff]
    %v81 = vld [vmem:[#allocation5 + $0x58] sm:$0xff]
    %v82 = vld [vmem:[#allocation5 + $0x60] sm:$0xff]
    %v83 = vld [vmem:[#allocation5 + $0x68] sm:$0xff]
    %v84 = vld [vmem:[#allocation5 + $0x70] sm:$0xff]
    %v85 = vld [vmem:[#allocation5 + $0x78] sm:$0xff]
    %v86 = vld [vmem:[#allocation5 + $0x80] sm:$0xff]
    %v87 = vld [vmem:[#allocation5 + $0x88] sm:$0xff]
    %v88 = vld [vmem:[#allocation5 + $0x90] sm:$0xff]
    %v89 = vld [vmem:[#allocation5 + $0x98] sm:$0xff]
    %v90 = vld [vmem:[#allocation5 + $0xa0] sm:$0xff]
    %v91 = vld [vmem:[#allocation5 + $0xa8] sm:$0xff]
    %v92 = vld [vmem:[#allocation5 + $0xb0] sm:$0xff]
    %v93 = vld [vmem:[#allocation5 + $0xb8] sm:$0xff]
    %v94 = vld [vmem:[#allocation5 + $0xc0] sm:$0xff]
    %v95 = vld [vmem:[#allocation5 + $0xc8] sm:$0xff]
    %v96 = vld [vmem:[#allocation5 + $0xd0] sm:$0xff]
    %v97 = vld [vmem:[#allocation5 + $0xd8] sm:$0xff]
    %v98 = vld [vmem:[#allocation5 + $0xe0] sm:$0xff]
    %v99 = vld [vmem:[#allocation5 + $0xe8] sm:$0xff]
    %v100 = vld [vmem:[#allocation5 + $0xf0] sm:$0xff]
    %v101 = vld [vmem:[#allocation5 + $0xf8] sm:$0xff]
    %v102 = vld [vmem:[#allocation5 + $0x100] sm:$0xff]
    %v103 = vld [vmem:[#allocation5 + $0x108] sm:$0xff]
    %v104 = vld [vmem:[#allocation5 + $0x110] sm:$0xff]
    %v105 = vld [vmem:[#allocation5 + $0x118] sm:$0xff]
    %v106 = vld [vmem:[#allocation5 + $0x120] sm:$0xff]
    %v107 = vld [vmem:[#allocation5 + $0x128] sm:$0xff]
    %v108 = vld [vmem:[#allocation5 + $0x130] sm:$0xff]
    %v109 = vld [vmem:[#allocation5 + $0x138] sm:$0xff]
    %v110 = vld [vmem:[#allocation5 + $0x140] sm:$0xff]
    %v111 = vld [vmem:[#allocation5 + $0x148] sm:$0xff]
    %v112 = vld [vmem:[#allocation5 + $0x150] sm:$0xff]
    %v113 = vld [vmem:[#allocation5 + $0x158] sm:$0xff]
    %v114 = vld [vmem:[#allocation5 + $0x160] sm:$0xff]
    %v115 = vld [vmem:[#allocation5 + $0x168] sm:$0xff]
    %v116 = vld [vmem:[#allocation5 + $0x170] sm:$0xff]
    %v117 = vld [vmem:[#allocation5 + $0x178] sm:$0xff]
    %v118 = vld [vmem:[#allocation5 + $0x180] sm:$0xff]
    %v119 = vld [vmem:[#allocation5 + $0x188] sm:$0xff]
    %v120 = vld [vmem:[#allocation5 + $0x190] sm:$0xff]
    %v121 = vld [vmem:[#allocation5 + $0x198] sm:$0xff]
    %v122 = vld [vmem:[#allocation5 + $0x1a0] sm:$0xff]
    %v123 = vld [vmem:[#allocation5 + $0x1a8] sm:$0xff]
    %v124 = vld [vmem:[#allocation5 + $0x1b0] sm:$0xff]
    %v125 = vld [vmem:[#allocation5 + $0x1b8] sm:$0xff]
    %v126 = vld [vmem:[#allocation5 + $0x1c0] sm:$0xff]
    %v127 = vld [vmem:[#allocation5 + $0x1c8] sm:$0xff]
    %v128 = vld [vmem:[#allocation5 + $0x1d0] sm:$0xff]
    %v129 = vld [vmem:[#allocation5 + $0x1d8] sm:$0xff]
    %v130 = vld [vmem:[#allocation5 + $0x1e0] sm:$0xff]
    %v131 = vld [vmem:[#allocation5 + $0x1e8] sm:$0xff]
    %v132 = vld [vmem:[#allocation5 + $0x1f0] sm:$0xff]
    %v133 = vld [vmem:[#allocation5 + $0x1f8] sm:$0xff]
    %v134 = vld [vmem:[#allocation5 + $0x200] sm:$0xff]
    %v135 = vld [vmem:[#allocation5 + $0x208] sm:$0xff]
    %v136 = vld [vmem:[#allocation5 + $0x210] sm:$0xff]
    %v137 = vld [vmem:[#allocation5 + $0x218] sm:$0xff]
    %v138 = vld [vmem:[#allocation5 + $0x220] sm:$0xff]
    %v139 = vld [vmem:[#allocation5 + $0x228] sm:$0xff]
    %v140 = vld [vmem:[#allocation5 + $0x230] sm:$0xff]
    %v141 = vld [vmem:[#allocation5 + $0x238] sm:$0xff]
    %v142 = vld [vmem:[#allocation5 + $0x240] sm:$0xff]
    %v143 = vld [vmem:[#allocation5 + $0x248] sm:$0xff]
    %v144 = vld [vmem:[#allocation5 + $0x250] sm:$0xff]
    %v145 = vld [vmem:[#allocation5 + $0x258] sm:$0xff]
    %v146 = vld [vmem:[#allocation5 + $0x260] sm:$0xff]
    %v147 = vld [vmem:[#allocation5 + $0x268] sm:$0xff]
    %v148 = vld [vmem:[#allocation5 + $0x270] sm:$0xff]
    %v149 = vld [vmem:[#allocation5 + $0x278] sm:$0xff]
    %v150 = vld [vmem:[#allocation5 + $0x280] sm:$0xff]
    %v151 = vld [vmem:[#allocation5 + $0x288] sm:$0xff]
    %v152 = vld [vmem:[#allocation5 + $0x290] sm:$0xff]
    %v153 = vld [vmem:[#allocation5 + $0x298] sm:$0xff]
    %v154 = vld [vmem:[#allocation5 + $0x2a0] sm:$0xff]
    %v155 = vld [vmem:[#allocation5 + $0x2a8] sm:$0xff]
    %v156 = vld [vmem:[#allocation5 + $0x2b0] sm:$0xff]
    %v157 = vld [vmem:[#allocation5 + $0x2b8] sm:$0xff]
    %v158 = vld [vmem:[#allocation5 + $0x2c0] sm:$0xff]
    %v159 = vld [vmem:[#allocation5 + $0x2c8] sm:$0xff]
    %v160 = vld [vmem:[#allocation5 + $0x2d0] sm:$0xff]
    %v161 = vld [vmem:[#allocation5 + $0x2d8] sm:$0xff]
    %v162 = vld [vmem:[#allocation5 + $0x2e0] sm:$0xff]
    %v163 = vld [vmem:[#allocation5 + $0x2e8] sm:$0xff]
    %v164 = vld [vmem:[#allocation5 + $0x2f0] sm:$0xff]
    %v165 = vld [vmem:[#allocation5 + $0x2f8] sm:$0xff]
    %v166 = vld [vmem:[#allocation5 + $0x300] sm:$0xff]
    %v167 = vld [vmem:[#allocation5 + $0x308] sm:$0xff]
    %v168 = vld [vmem:[#allocation5 + $0x310] sm:$0xff]
    %v169 = vld [vmem:[#allocation5 + $0x318] sm:$0xff]
    %v170 = vld [vmem:[#allocation5 + $0x320] sm:$0xff]
    %v171 = vld [vmem:[#allocation5 + $0x328] sm:$0xff]
    %v172 = vld [vmem:[#allocation5 + $0x330] sm:$0xff]
    %v173 = vld [vmem:[#allocation5 + $0x338] sm:$0xff]
    %v174 = vld [vmem:[#allocation5 + $0x340] sm:$0xff]
    %v175 = vld [vmem:[#allocation5 + $0x348] sm:$0xff]
    %v176 = vld [vmem:[#allocation5 + $0x350] sm:$0xff]
    %v177 = vld [vmem:[#allocation5 + $0x358] sm:$0xff]
    %v178 = vld [vmem:[#allocation5 + $0x360] sm:$0xff]
    %v179 = vld [vmem:[#allocation5 + $0x368] sm:$0xff]
    %v180 = vld [vmem:[#allocation5 + $0x370] sm:$0xff]
    %v181 = vld [vmem:[#allocation5 + $0x378] sm:$0xff]
    %v182 = vld [vmem:[#allocation5 + $0x380] sm:$0xff]
    %v183 = vld [vmem:[#allocation5 + $0x388] sm:$0xff]
    %v184 = vld [vmem:[#allocation5 + $0x390] sm:$0xff]
    %v185 = vld [vmem:[#allocation5 + $0x398] sm:$0xff]
    %v186 = vld [vmem:[#allocation5 + $0x3a0] sm:$0xff]
    %v187 = vld [vmem:[#allocation5 + $0x3a8] sm:$0xff]
    %v188 = vld [vmem:[#allocation5 + $0x3b0] sm:$0xff]
    %v189 = vld [vmem:[#allocation5 + $0x3b8] sm:$0xff]
    %v190 = vld [vmem:[#allocation5 + $0x3c0] sm:$0xff]
    %v191 = vld [vmem:[#allocation5 + $0x3c8] sm:$0xff]
    %v192 = vld [vmem:[#allocation5 + $0x3d0] sm:$0xff]
    %v193 = vld [vmem:[#allocation5 + $0x3d8] sm:$0xff]
    %v194 = vld [vmem:[#allocation5 + $0x3e0] sm:$0xff]
    %v195 = vld [vmem:[#allocation5 + $0x3e8] sm:$0xff]
    %v196 = vld [vmem:[#allocation5 + $0x3f0] sm:$0xff]
    %v197 = vld [vmem:[#allocation5 + $0x3f8] sm:$0xff]
    %v198 = vld [vmem:[#allocation7] sm:$0x3]
    %v200 = vlaneseq
    %v201 = vshrl.u32 %v200, 7
    %v202 = vsub.s32 0, %v201
    %v203 = vrot.slane %v198, %v202
    %v204 = vlaneseq
    %v205 = vshrl.u32 %v204, 7
    %v206 = vsub.s32 1, %v205
    %v207 = vrot.slane %v198, %v206
    %v226 = vcombine.low %v54, %v55
    %v227 = vcombine.low %v56, %v57
    %v228 = vcombine.low %v58, %v59
    %v229 = vcombine.low %v60, %v61
    %v231 = vunpack.c.l.s4 1966171168
    %v232 = vunpack.c.0.s8 %v231
    %v233 = vlaneseq
    %v234 = vshrl.u32 %v233, 7
    %v235 = vsub.s32 %v232, %v234
    %v236 = vrot.slane %v226, %v235
    %v238 = vunpack.c.l.s4 1966171168
    %v239 = vunpack.c.0.s8 %v238
    %v240 = vlaneseq
    %v241 = vshrl.u32 %v240, 7
    %v242 = vsub.s32 %v239, %v241
    %v243 = vrot.slane %v227, %v242
    %v245 = vunpack.c.l.s4 1966171168
    %v246 = vunpack.c.0.s8 %v245
    %v247 = vlaneseq
    %v248 = vshrl.u32 %v247, 7
    %v249 = vsub.s32 %v246, %v248
    %v250 = vrot.slane %v228, %v249
    %v252 = vunpack.c.l.s4 1966171168
    %v253 = vunpack.c.0.s8 %v252
    %v254 = vlaneseq
    %v255 = vshrl.u32 %v254, 7
    %v256 = vsub.s32 %v253, %v255
    %v257 = vrot.slane %v229, %v256
    %v258 = vcombine.low %v236, %v243
    %v259 = vcombine.high %v236, %v243
    %v260 = vcombine.low %v250, %v257
    %v261 = vcombine.high %v250, %v257
    %v263 = vunpack.c.l.s4 1966171168
    %v264 = vunpack.c.0.s8 %v263
    %v265 = vlaneseq
    %v266 = vshrl.u32 %v265, 7
    %v267 = vsub.s32 %v264, %v266
    %v268 = vrot.slane %v258, %v267
    %v270 = vunpack.c.l.s4 1966171168
    %v271 = vunpack.c.0.s8 %v270
    %v272 = vlaneseq
    %v273 = vshrl.u32 %v272, 7
    %v274 = vsub.s32 %v271, %v273
    %v275 = vrot.slane %v259, %v274
    %v277 = vunpack.c.l.s4 1966171168
    %v278 = vunpack.c.0.s8 %v277
    %v279 = vlaneseq
    %v280 = vshrl.u32 %v279, 7
    %v281 = vsub.s32 %v278, %v280
    %v282 = vrot.slane %v260, %v281
    %v284 = vunpack.c.l.s4 1966171168
    %v285 = vunpack.c.0.s8 %v284
    %v286 = vlaneseq
    %v287 = vshrl.u32 %v286, 7
    %v288 = vsub.s32 %v285, %v287
    %v289 = vrot.slane %v261, %v288
    %v290 = vcombine.low %v268, %v282
    %v291 = vcombine.high %v268, %v282
    %v292 = vcombine.low %v275, %v289
    %v293 = vcombine.high %v275, %v289
    %v294 = vcombine.low %v62, %v63
    %v295 = vcombine.low %v64, %v65
    %v296 = vcombine.low %v66, %v67
    %v297 = vcombine.low %v68, %v69
    %v299 = vunpack.c.l.s4 1966171168
    %v300 = vunpack.c.0.s8 %v299
    %v301 = vlaneseq
    %v302 = vshrl.u32 %v301, 7
    %v303 = vsub.s32 %v300, %v302
    %v304 = vrot.slane %v294, %v303
    %v306 = vunpack.c.l.s4 1966171168
    %v307 = vunpack.c.0.s8 %v306
    %v308 = vlaneseq
    %v309 = vshrl.u32 %v308, 7
    %v310 = vsub.s32 %v307, %v309
    %v311 = vrot.slane %v295, %v310
    %v313 = vunpack.c.l.s4 1966171168
    %v314 = vunpack.c.0.s8 %v313
    %v315 = vlaneseq
    %v316 = vshrl.u32 %v315, 7
    %v317 = vsub.s32 %v314, %v316
    %v318 = vrot.slane %v296, %v317
    %v320 = vunpack.c.l.s4 1966171168
    %v321 = vunpack.c.0.s8 %v320
    %v322 = vlaneseq
    %v323 = vshrl.u32 %v322, 7
    %v324 = vsub.s32 %v321, %v323
    %v325 = vrot.slane %v297, %v324
    %v326 = vcombine.low %v304, %v311
    %v327 = vcombine.high %v304, %v311
    %v328 = vcombine.low %v318, %v325
    %v329 = vcombine.high %v318, %v325
    %v331 = vunpack.c.l.s4 1966171168
    %v332 = vunpack.c.0.s8 %v331
    %v333 = vlaneseq
    %v334 = vshrl.u32 %v333, 7
    %v335 = vsub.s32 %v332, %v334
    %v336 = vrot.slane %v326, %v335
    %v338 = vunpack.c.l.s4 1966171168
    %v339 = vunpack.c.0.s8 %v338
    %v340 = vlaneseq
    %v341 = vshrl.u32 %v340, 7
    %v342 = vsub.s32 %v339, %v341
    %v343 = vrot.slane %v327, %v342
    %v345 = vunpack.c.l.s4 1966171168
    %v346 = vunpack.c.0.s8 %v345
    %v347 = vlaneseq
    %v348 = vshrl.u32 %v347, 7
    %v349 = vsub.s32 %v346, %v348
    %v350 = vrot.slane %v328, %v349
    %v352 = vunpack.c.l.s4 1966171168
    %v353 = vunpack.c.0.s8 %v352
    %v354 = vlaneseq
    %v355 = vshrl.u32 %v354, 7
    %v356 = vsub.s32 %v353, %v355
    %v357 = vrot.slane %v329, %v356
    %v358 = vcombine.low %v336, %v350
    %v359 = vcombine.high %v336, %v350
    %v360 = vcombine.low %v343, %v357
    %v361 = vcombine.high %v343, %v357
    %370 = vmatprep.subr.mxu0 %v71
    %371 = vmatpush1.msra.mxu0 %v70
    %372 = vmatprep.subr.mxu0 %v73
    %373 = vmatpush1.msra.mxu0 %v72
    %374 = vmatprep.subr.mxu0 %v75
    %375 = vmatpush1.msra.mxu0 %v74
    %376 = vmatprep.subr.mxu0 %v77
    %377 = vmatpush1.msra.mxu0 %v76
    %378 = vmatprep.subr.mxu0 %v79
    %379 = vmatpush1.msra.mxu0 %v78
    %380 = vmatprep.subr.mxu0 %v81
    %381 = vmatpush1.msra.mxu0 %v80
    %382 = vmatprep.subr.mxu0 %v83
    %383 = vmatpush1.msra.mxu0 %v82
    %384 = vmatprep.subr.mxu0 %v85
    %385 = vmatpush1.msra.mxu0 %v84
    %386 = vmatprep.subr.mxu0 %v87
    %387 = vmatpush1.msra.mxu0 %v86
    %388 = vmatprep.subr.mxu0 %v89
    %389 = vmatpush1.msra.mxu0 %v88
    %390 = vmatprep.subr.mxu0 %v91
    %391 = vmatpush1.msra.mxu0 %v90
    %392 = vmatprep.subr.mxu0 %v93
    %393 = vmatpush1.msra.mxu0 %v92
    %394 = vmatprep.subr.mxu0 %v95
    %395 = vmatpush1.msra.mxu0 %v94
    %396 = vmatprep.subr.mxu0 %v97
    %397 = vmatpush1.msra.mxu0 %v96
    %398 = vmatprep.subr.mxu0 %v99
    %399 = vmatpush1.msra.mxu0 %v98
    %400 = vmatprep.subr.mxu0 %v101
    %401 = vmatpush1.msra.mxu0 %v100
    %402 = vmatprep.subr.mxu0 %v103
    %403 = vmatpush1.msra.mxu0 %v102
    %404 = vmatprep.subr.mxu0 %v105
    %405 = vmatpush1.msra.mxu0 %v104
    %406 = vmatprep.subr.mxu0 %v107
    %407 = vmatpush1.msra.mxu0 %v106
    %408 = vmatprep.subr.mxu0 %v109
    %409 = vmatpush1.msra.mxu0 %v108
    %410 = vmatprep.subr.mxu0 %v111
    %411 = vmatpush1.msra.mxu0 %v110
    %412 = vmatprep.subr.mxu0 %v113
    %413 = vmatpush1.msra.mxu0 %v112
    %414 = vmatprep.subr.mxu0 %v115
    %415 = vmatpush1.msra.mxu0 %v114
    %416 = vmatprep.subr.mxu0 %v117
    %417 = vmatpush1.msra.mxu0 %v116
    %418 = vmatprep.subr.mxu0 %v119
    %419 = vmatpush1.msra.mxu0 %v118
    %420 = vmatprep.subr.mxu0 %v121
    %421 = vmatpush1.msra.mxu0 %v120
    %422 = vmatprep.subr.mxu0 %v123
    %423 = vmatpush1.msra.mxu0 %v122
    %424 = vmatprep.subr.mxu0 %v125
    %425 = vmatpush1.msra.mxu0 %v124
    %426 = vmatprep.subr.mxu0 %v127
    %427 = vmatpush1.msra.mxu0 %v126
    %428 = vmatprep.subr.mxu0 %v129
    %429 = vmatpush1.msra.mxu0 %v128
    %430 = vmatprep.subr.mxu0 %v131
    %431 = vmatpush1.msra.mxu0 %v130
    %432 = vmatprep.subr.mxu0 %v133
    %433 = vmatpush1.msra.mxu0 %v132
    %434 = vmatprep.mubr.f32.mxu0 %v292
    %435 = vmatmul.mubr.f32.gmra.mrb[0].mxu0 %v290
    %v436 = vpop.f32.mrb[0].mxu0
    %v437 = vadd.f32 %v203, %v436
    %v438 = vpop.f32.mrb[0].mxu0
    %v439 = vadd.f32 %v207, %v438
    %440 = vmatprep.mubr.f32.mxu0 %v360
    %441 = vmatmul.mubr.f32.gmra.mrb[0].mxu0 %v358
    %v442 = vpop.f32.mrb[0].mxu0
    %v443 = vadd.f32 %v203, %v442
    %v444 = vpop.f32.mrb[0].mxu0
    %v445 = vadd.f32 %v207, %v444
    %446 = vdwg.mxu0
    %447 = vmatprep.subr.mxu0 %v135
    %448 = vmatpush1.msra.mxu0 %v134
    %449 = vmatprep.subr.mxu0 %v137
    %450 = vmatpush1.msra.mxu0 %v136
    %451 = vmatprep.subr.mxu0 %v139
    %452 = vmatpush1.msra.mxu0 %v138
    %453 = vmatprep.subr.mxu0 %v141
    %454 = vmatpush1.msra.mxu0 %v140
    %455 = vmatprep.subr.mxu0 %v143
    %456 = vmatpush1.msra.mxu0 %v142
    %457 = vmatprep.subr.mxu0 %v145
    %458 = vmatpush1.msra.mxu0 %v144
    %459 = vmatprep.subr.mxu0 %v147
    %460 = vmatpush1.msra.mxu0 %v146
    %461 = vmatprep.subr.mxu0 %v149
    %462 = vmatpush1.msra.mxu0 %v148
    %463 = vmatprep.subr.mxu0 %v151
    %464 = vmatpush1.msra.mxu0 %v150
    %465 = vmatprep.subr.mxu0 %v153
    %466 = vmatpush1.msra.mxu0 %v152
    %467 = vmatprep.subr.mxu0 %v155
    %468 = vmatpush1.msra.mxu0 %v154
    %469 = vmatprep.subr.mxu0 %v157
    %470 = vmatpush1.msra.mxu0 %v156
    %471 = vmatprep.subr.mxu0 %v159
    %472 = vmatpush1.msra.mxu0 %v158
    %473 = vmatprep.subr.mxu0 %v161
    %474 = vmatpush1.msra.mxu0 %v160
    %475 = vmatprep.subr.mxu0 %v163
    %476 = vmatpush1.msra.mxu0 %v162
    %477 = vmatprep.subr.mxu0 %v165
    %478 = vmatpush1.msra.mxu0 %v164
    %479 = vmatprep.subr.mxu0 %v167
    %480 = vmatpush1.msra.mxu0 %v166
    %481 = vmatprep.subr.mxu0 %v169
    %482 = vmatpush1.msra.mxu0 %v168
    %483 = vmatprep.subr.mxu0 %v171
    %484 = vmatpush1.msra.mxu0 %v170
    %485 = vmatprep.subr.mxu0 %v173
    %486 = vmatpush1.msra.mxu0 %v172
    %487 = vmatprep.subr.mxu0 %v175
    %488 = vmatpush1.msra.mxu0 %v174
    %489 = vmatprep.subr.mxu0 %v177
    %490 = vmatpush1.msra.mxu0 %v176
    %491 = vmatprep.subr.mxu0 %v179
    %492 = vmatpush1.msra.mxu0 %v178
    %493 = vmatprep.subr.mxu0 %v181
    %494 = vmatpush1.msra.mxu0 %v180
    %495 = vmatprep.subr.mxu0 %v183
    %496 = vmatpush1.msra.mxu0 %v182
    %497 = vmatprep.subr.mxu0 %v185
    %498 = vmatpush1.msra.mxu0 %v184
    %499 = vmatprep.subr.mxu0 %v187
    %500 = vmatpush1.msra.mxu0 %v186
    %501 = vmatprep.subr.mxu0 %v189
    %502 = vmatpush1.msra.mxu0 %v188
    %503 = vmatprep.subr.mxu0 %v191
    %504 = vmatpush1.msra.mxu0 %v190
    %505 = vmatprep.subr.mxu0 %v193
    %506 = vmatpush1.msra.mxu0 %v192
    %507 = vmatprep.subr.mxu0 %v195
    %508 = vmatpush1.msra.mxu0 %v194
    %509 = vmatprep.subr.mxu0 %v197
    %510 = vmatpush1.msra.mxu0 %v196
    %511 = vmatprep.mubr.f32.mxu0 %v293
    %512 = vmatmul.mubr.f32.gmra.mrb[0].mxu0 %v291
    %v513 = vpop.f32.mrb[0].mxu0
    %v514 = vadd.f32 %v437, %v513
    %v515 = vpop.f32.mrb[0].mxu0
    %v516 = vadd.f32 %v439, %v515
    %517 = vmatprep.mubr.f32.mxu0 %v361
    %518 = vmatmul.mubr.f32.gmra.mrb[0].mxu0 %v359
    %v519 = vpop.f32.mrb[0].mxu0
    %v520 = vadd.f32 %v443, %v519
    %v521 = vpop.f32.mrb[0].mxu0
    %v522 = vadd.f32 %v445, %v521
    %523 = vdwg.mxu0
    %vm524 = vcmp.gt.f32.partialorder %v514, 0.0
    %vm525 = vcmp.gt.f32.partialorder %v516, 0.0
    %vm526 = vcmp.gt.f32.partialorder %v520, 0.0
    %vm527 = vcmp.gt.f32.partialorder %v522, 0.0
    %v528 = vmul.f32 %v514, 0.01
    %v529 = vmul.f32 %v516, 0.01
    %v530 = vmul.f32 %v520, 0.01
    %v531 = vmul.f32 %v522, 0.01
    %v532 = vsel %vm524, %v514, %v528
    %v533 = vsel %vm525, %v516, %v529
    %v534 = vsel %vm526, %v520, %v530
    %v535 = vsel %vm527, %v522, %v531
    %v540 = vcombine.low %v532, %v533
    %v541 = vcombine.high %v532, %v533
    %v543 = vunpack.c.l.s4 1966171168
    %v544 = vunpack.c.0.s8 %v543
    %v545 = vlaneseq
    %v546 = vshrl.u32 %v545, 7
    %v547 = vsub.s32 %v544, %v546
    %v548 = vrot.slane %v540, %v547
    %v550 = vunpack.c.l.s4 1966171168
    %v551 = vunpack.c.0.s8 %v550
    %v552 = vlaneseq
    %v553 = vshrl.u32 %v552, 7
    %v554 = vsub.s32 %v551, %v553
    %v555 = vrot.slane %v541, %v554
    %v556 = vcombine.high %v548, %v548
    %v557 = vcombine.high %v555, %v555
    %v559 = vunpack.c.l.s4 1966171168
    %v560 = vunpack.c.0.s8 %v559
    %v561 = vlaneseq
    %v562 = vshrl.u32 %v561, 7
    %v563 = vsub.s32 %v560, %v562
    %v564 = vrot.slane %v548, %v563
    %v566 = vunpack.c.l.s4 1966171168
    %v567 = vunpack.c.0.s8 %v566
    %v568 = vlaneseq
    %v569 = vshrl.u32 %v568, 7
    %v570 = vsub.s32 %v567, %v569
    %v571 = vrot.slane %v555, %v570
    %v573 = vunpack.c.l.s4 1966171168
    %v574 = vunpack.c.0.s8 %v573
    %v575 = vlaneseq
    %v576 = vshrl.u32 %v575, 7
    %v577 = vsub.s32 %v574, %v576
    %v578 = vrot.slane %v556, %v577
    %v580 = vunpack.c.l.s4 1966171168
    %v581 = vunpack.c.0.s8 %v580
    %v582 = vlaneseq
    %v583 = vshrl.u32 %v582, 7
    %v584 = vsub.s32 %v581, %v583
    %v585 = vrot.slane %v557, %v584
    %v586 = vcombine.high %v564, %v564
    %v587 = vcombine.high %v571, %v571
    %v588 = vcombine.high %v578, %v578
    %v589 = vcombine.high %v585, %v585
    %v590 = vcombine.low %v534, %v535
    %v591 = vcombine.high %v534, %v535
    %v593 = vunpack.c.l.s4 1966171168
    %v594 = vunpack.c.0.s8 %v593
    %v595 = vlaneseq
    %v596 = vshrl.u32 %v595, 7
    %v597 = vsub.s32 %v594, %v596
    %v598 = vrot.slane %v590, %v597
    %v600 = vunpack.c.l.s4 1966171168
    %v601 = vunpack.c.0.s8 %v600
    %v602 = vlaneseq
    %v603 = vshrl.u32 %v602, 7
    %v604 = vsub.s32 %v601, %v603
    %v605 = vrot.slane %v591, %v604
    %v606 = vcombine.high %v598, %v598
    %v607 = vcombine.high %v605, %v605
    %v609 = vunpack.c.l.s4 1966171168
    %v610 = vunpack.c.0.s8 %v609
    %v611 = vlaneseq
    %v612 = vshrl.u32 %v611, 7
    %v613 = vsub.s32 %v610, %v612
    %v614 = vrot.slane %v598, %v613
    %v616 = vunpack.c.l.s4 1966171168
    %v617 = vunpack.c.0.s8 %v616
    %v618 = vlaneseq
    %v619 = vshrl.u32 %v618, 7
    %v620 = vsub.s32 %v617, %v619
    %v621 = vrot.slane %v605, %v620
    %v623 = vunpack.c.l.s4 1966171168
    %v624 = vunpack.c.0.s8 %v623
    %v625 = vlaneseq
    %v626 = vshrl.u32 %v625, 7
    %v627 = vsub.s32 %v624, %v626
    %v628 = vrot.slane %v606, %v627
    %v630 = vunpack.c.l.s4 1966171168
    %v631 = vunpack.c.0.s8 %v630
    %v632 = vlaneseq
    %v633 = vshrl.u32 %v632, 7
    %v634 = vsub.s32 %v631, %v633
    %v635 = vrot.slane %v607, %v634
    %v636 = vcombine.high %v614, %v614
    %v637 = vcombine.high %v621, %v621
    %v638 = vcombine.high %v628, %v628
    %v639 = vcombine.high %v635, %v635
    %v656 = vlaneseq
    %vm657 = vcmp.ge.s32.totalorder %v656, 0
    %vm658 = vcmp.lt.s32.totalorder %v656, 256
    %vm659 = vmand %vm657, %vm658
    %660 = vst.msk [vmem:[#allocation8] sm:$0x3] %vm659, %v564
    %661 = vst.msk [vmem:[#allocation8 + $0x2] sm:$0x3] %vm659, %v578
    %662 = vst.msk [vmem:[#allocation8 + $0x4] sm:$0x3] %vm659, %v586
    %663 = vst.msk [vmem:[#allocation8 + $0x6] sm:$0x3] %vm659, %v588
    %664 = vst.msk [vmem:[#allocation8 + $0x8] sm:$0x3] %vm659, %v571
    %665 = vst.msk [vmem:[#allocation8 + $0xa] sm:$0x3] %vm659, %v585
    %666 = vst.msk [vmem:[#allocation8 + $0xc] sm:$0x3] %vm659, %v587
    %667 = vst.msk [vmem:[#allocation8 + $0xe] sm:$0x3] %vm659, %v589
    %668 = vst.msk [vmem:[#allocation8 + $0x10] sm:$0x3] %vm659, %v614
    %669 = vst.msk [vmem:[#allocation8 + $0x12] sm:$0x3] %vm659, %v628
    %670 = vst.msk [vmem:[#allocation8 + $0x14] sm:$0x3] %vm659, %v636
    %671 = vst.msk [vmem:[#allocation8 + $0x16] sm:$0x3] %vm659, %v638
    %672 = vst.msk [vmem:[#allocation8 + $0x18] sm:$0x3] %vm659, %v621
    %673 = vst.msk [vmem:[#allocation8 + $0x1a] sm:$0x3] %vm659, %v635
    %674 = vst.msk [vmem:[#allocation8 + $0x1c] sm:$0x3] %vm659, %v637
    %675 = vst.msk [vmem:[#allocation8 + $0x1e] sm:$0x3] %vm659, %v639
    // Predicated region
    $region26: #{tpu_custom_call.1} parent=1 // pred_check
      _
    $region27: #{tpu_custom_call.1} parent=1 // pred_check_branch
      %677 = sbr.rel (0) target = $region29
    $region28: #{tpu_custom_call.1} parent=1 // pred_region
      %s679 = ssub.s32 512, 32
      %680 = vsyncadd [#allocation4], %s679
      %s681 = sshll.u32 [#allocation8], 4
      %s682 = int_to_ptr.vmem [resolvable:$true] %s681
      %687 = dma.vmem_to_hbm [thread:$0]  %s682, 32, %s3, [#allocation4], 32, 32, 2
    $region29: #{tpu_custom_call.1} parent=1 // pred_fallthru
      _
    // Predicated region
    $region30: #{tpu_custom_call.1} parent=1 // pred_check
      _
    $region31: #{tpu_custom_call.1} parent=1 // pred_check_branch
      %689 = sbr.rel (0) target = $region33
    $region32: #{tpu_custom_call.1} parent=1 // pred_region
      %690 = dma.done [#allocation4], 512
    $region33: #{tpu_custom_call.1} parent=1 // pred_fallthru
      _
    %691 = vsyncpa [#allocation3], 1
    %692 = vsyncpa [#allocation6], 1
    %693 = vsyncpa [#allocation4], 1

</llo_original>
